<compile_context>
chip_gen: v7x
topology: tpu7x:2x2x1
jax: 0.10.0
libtpu: 0.0.40
codegen_flags: <defaults>
</compile_context>

<pallas_src>
import jax
import jax.numpy as jnp
from jax.experimental import pallas as pl
from jax.experimental.pallas import tpu as pltpu

_LANE = 128


def _cross_attention_kernel(gamma_ref, xa_ref, xb_ref, oa_ref, ob_ref,
                            ea_ref, eb_ref):
    """Grid = (batch_block, phase, n_tile).

    gamma_ref        : (1,) SMEM scalar
    xa_ref / xb_ref  : (bt, C, tn) VMEM input tiles
    oa_ref / ob_ref  : (bt, C, tn) VMEM output tiles
    ea_ref / eb_ref  : (bt, C, C) f32 scratch; hold the channel energies during
                       phase 0 and are overwritten in place with the attention
                       matrices at the start of phase 1.
    """
    ph = pl.program_id(1)
    nt = pl.program_id(2)

    @pl.when(jnp.logical_and(ph == 0, nt == 0))
    def _zero_accumulators():
        ea_ref[...] = jnp.zeros_like(ea_ref)
        eb_ref[...] = jnp.zeros_like(eb_ref)

    @pl.when(ph == 0)
    def _accumulate_energy():
        xa = xa_ref[...].astype(jnp.float32)
        xb = xb_ref[...].astype(jnp.float32)
        # energya[b,c,d] = sum_n xa[b,c,n] * xb[b,d,n]; energyb is its per-batch
        # transpose, accumulated directly with swapped operands so no XLU
        # transpose is ever needed.
        ea_ref[...] += jnp.einsum('bcn,bdn->bcd', xa, xb,
                                  preferred_element_type=jnp.float32)
        eb_ref[...] += jnp.einsum('bcn,bdn->bcd', xb, xa,
                                  preferred_element_type=jnp.float32)

    @pl.when(ph == 1)
    def _emit_outputs():
        @pl.when(nt == 0)
        def _energies_to_attention():
            # softmax(rowmax(E) - E) == exp(rowmin(E) - E) / rowsum(exp(...)):
            # a single row-min reduce + subtract instead of two max passes.
            # The normalizer reciprocal goes to the EUP slot (approx=True).
            def to_attention(e_ref):
                e = e_ref[...]
                p = jnp.exp(jnp.min(e, axis=-1, keepdims=True) - e)
                e_ref[...] = p * pl.reciprocal(
                    jnp.sum(p, axis=-1, keepdims=True), approx=True)

            to_attention(ea_ref)
            to_attention(eb_ref)

        gamma = gamma_ref[0]
        xa = xa_ref[...].astype(jnp.float32)
        xb = xb_ref[...].astype(jnp.float32)
        # Note: for large C on v6e/v7x, casting the matmul operands to bfloat16
        # (keeping f32 accumulation) recovers 2-3x MXU throughput; kept f32 here
        # to preserve the module's f32 numerics for validation.
        out_a = jnp.einsum('bcd,bdn->bcn', ea_ref[...], xa,
                           preferred_element_type=jnp.float32)
        out_b = jnp.einsum('bcd,bdn->bcn', eb_ref[...], xb,
                           preferred_element_type=jnp.float32)
        oa_ref[...] = (gamma * out_a + xa).astype(oa_ref.dtype)
        ob_ref[...] = (gamma * out_b + xb).astype(ob_ref.dtype)


def _largest_divisor(n, cap):
    """Largest divisor of n that is <= cap (at least 1)."""
    cap = max(1, min(n, cap))
    for d in range(cap, 0, -1):
        if n % d == 0:
            return d
    return 1


def _choose_tiling(batch, channels, n_pad, itemsize):
    """Pick (batch_tile, n_tile) so streamed blocks + scratch fit comfortably
    in VMEM on every generation (v7x has only 64 MiB physical)."""
    stream_budget = 16 * 1024 * 1024   # 2 in + 2 out blocks, double-buffered
    scratch_budget = 4 * 1024 * 1024   # 2 x (bt, C, C) f32 accumulators

    max_bt_scratch = max(1, scratch_budget // (2 * channels * channels * 4))
    max_bt_stream = max(1, stream_budget // (8 * channels * _LANE * itemsize))
    bt = _largest_divisor(batch, min(max_bt_scratch, max_bt_stream))

    max_tn = max(_LANE, stream_budget // (8 * bt * channels * itemsize))
    tn = n_pad
    for cand in range(n_pad, 0, -_LANE):
        if n_pad % cand == 0 and cand <= max_tn:
            tn = cand
            break
    return bt, tn


def cross_attention(xa, xb, gamma):
    """xa, xb: (B, C, H, W). gamma: (1,). Returns (out_a, out_b), same shape."""
    B, C, H, W = xa.shape
    N = H * W
    n_pad = ((N + _LANE - 1) // _LANE) * _LANE

    gamma = jnp.asarray(gamma, jnp.float32).reshape((1,))
    xa_flat = xa.reshape(B, C, N)
    xb_flat = xb.reshape(B, C, N)
    if n_pad != N:
        pad = ((0, 0), (0, 0), (0, n_pad - N))
        xa_flat = jnp.pad(xa_flat, pad)   # zero columns: no effect on energy,
        xb_flat = jnp.pad(xb_flat, pad)   # padded outputs are sliced off below.

    bt, tn = _choose_tiling(B, C, n_pad, xa_flat.dtype.itemsize)
    grid = (B // bt, 2, n_pad // tn)

    in_spec = pl.BlockSpec((bt, C, tn), lambda bb, ph, nt: (bb, 0, nt))
    # During phase 0 the output index stays pinned at n-block 0, so output
    # buffers are only flushed after they are written in phase 1.
    out_spec = pl.BlockSpec((bt, C, tn), lambda bb, ph, nt: (bb, 0, ph * nt))

    out_a, out_b = pl.pallas_call(
        _cross_attention_kernel,
        out_shape=(
            jax.ShapeDtypeStruct((B, C, n_pad), xa.dtype),
            jax.ShapeDtypeStruct((B, C, n_pad), xb.dtype),
        ),
        grid=grid,
        in_specs=[
            pl.BlockSpec(memory_space=pltpu.MemorySpace.SMEM),  # gamma scalar
            in_spec,                                            # xa
            in_spec,                                            # xb
        ],
        out_specs=(out_spec, out_spec),
        scratch_shapes=[
            pltpu.VMEM((bt, C, C), jnp.float32),  # energy_a -> attention_a
            pltpu.VMEM((bt, C, C), jnp.float32),  # energy_b -> attention_b
        ],
        compiler_params=pltpu.CompilerParams(
            dimension_semantics=("parallel", "arbitrary", "arbitrary"),
            vmem_limit_bytes=32 * 1024 * 1024,
        ),
    )(gamma, xa_flat, xb_flat)

    out_a = out_a[:, :, :N].reshape(B, C, H, W)
    out_b = out_b[:, :, :N].reshape(B, C, H, W)
    return out_a, out_b


def _reference(xa, xb, gamma):
    """Pure-JAX reference mirroring the PyTorch forward."""
    B, C, H, W = xa.shape
    hi = jax.lax.Precision.HIGHEST
    qa = xa.reshape(B, C, -1)
    qb = xb.reshape(B, C, -1)
    energy_a = jnp.einsum('bcn,bdn->bcd', qa, qb, precision=hi)
    energy_b = jnp.einsum('bcn,bdn->bcd', qb, qa, precision=hi)

    def get_output(energy, xin_flat):
        mx = jnp.max(energy, axis=-1, keepdims=True)
        attn = jax.nn.softmax(mx - energy, axis=-1)
        out = jnp.einsum('bcd,bdn->bcn', attn, xin_flat, precision=hi)
        return gamma[0] * out + xin_flat

    oa = get_output(energy_a, qa).reshape(B, C, H, W)
    ob = get_output(energy_b, qb).reshape(B, C, H, W)
    return oa, ob


if __name__ == "__main__":
    key = jax.random.PRNGKey(0)
    k1, k2, k3, k4 = jax.random.split(key, 4)

    # Shape 1: lane-aligned spatial extent (16*16 = 256).
    B, C, H, W = 2, 8, 16, 16
    xa = 0.2 * jax.random.normal(k1, (B, C, H, W), dtype=jnp.float32)
    xb = 0.2 * jax.random.normal(k2, (B, C, H, W), dtype=jnp.float32)

    # nn.Parameter(torch.zeros(1)) -> gamma starts at exactly zero.
    gamma0 = jnp.zeros((1,), dtype=jnp.float32)
    oa, ob = cross_attention(xa, xb, gamma0)
    jax.block_until_ready((oa, ob))
    ra, rb = _reference(xa, xb, gamma0)
    assert jnp.allclose(oa, ra, atol=1e-5, rtol=1e-5)
    assert jnp.allclose(ob, rb, atol=1e-5, rtol=1e-5)

    # Non-zero gamma exercises the full attention path (energies, softmax,
    # both output matmuls). Looser tolerance covers MXU precision + the
    # approx EUP reciprocal used for the softmax normalizer.
    gamma1 = jnp.array([0.5], dtype=jnp.float32)
    oa, ob = cross_attention(xa, xb, gamma1)
    jax.block_until_ready((oa, ob))
    ra, rb = _reference(xa, xb, gamma1)
    assert jnp.allclose(oa, ra, atol=2e-2, rtol=2e-2)
    assert jnp.allclose(ob, rb, atol=2e-2, rtol=2e-2)

    # Shape 2: spatial size not a multiple of 128 -> exercises lane padding.
    B2, C2, H2, W2 = 3, 8, 10, 10
    xc = 0.2 * jax.random.normal(k3, (B2, C2, H2, W2), dtype=jnp.float32)
    xd = 0.2 * jax.random.normal(k4, (B2, C2, H2, W2), dtype=jnp.float32)
    oc, od = cross_attention(xc, xd, gamma1)
    jax.block_until_ready((oc, od))
    rc, rd = _reference(xc, xd, gamma1)
    assert jnp.allclose(oc, rc, atol=2e-2, rtol=2e-2)
    assert jnp.allclose(od, rd, atol=2e-2, rtol=2e-2)

    print("KERNEL_OK")
</pallas_src>

<mosaic_0001>
module attributes {stable_mosaic.version = 11 : i64} {
  func.func @_cross_attention_kernel(%arg0: i32, %arg1: i32, %arg2: i32, %arg3: memref<1xf32, #tpu.memory_space<smem>>, %arg4: memref<2x8x256xf32, #tpu.memory_space<vmem>>, %arg5: memref<2x8x256xf32, #tpu.memory_space<vmem>>, %arg6: memref<2x8x256xf32, #tpu.memory_space<vmem>>, %arg7: memref<2x8x256xf32, #tpu.memory_space<vmem>>, %arg8: memref<2x8x8xf32, #tpu.memory_space<vmem>>, %arg9: memref<2x8x8xf32, #tpu.memory_space<vmem>>) attributes {dimension_semantics = [#tpu.dimension_semantics<parallel>, #tpu.dimension_semantics<arbitrary>, #tpu.dimension_semantics<arbitrary>], iteration_bounds = array<i64: 1, 2, 1>, scalar_prefetch = 0 : i64, scratch_operands = 2 : i64, tpu.core_type = #tpu.core_type<tc>, window_params = [{transform_indices = @transform_0, window_bounds = array<i64: 1>}, {transform_indices = @transform_1, window_bounds = array<i64: 2, 8, 256>}, {transform_indices = @transform_2, window_bounds = array<i64: 2, 8, 256>}, {transform_indices = @transform_3, window_bounds = array<i64: 2, 8, 256>}, {transform_indices = @transform_4, window_bounds = array<i64: 2, 8, 256>}]} {
    %c0_i32 = arith.constant 0 : i32
    %0 = arith.cmpi eq, %arg1, %c0_i32 : i32
    %c0_i32_0 = arith.constant 0 : i32
    %1 = arith.cmpi eq, %arg2, %c0_i32_0 : i32
    %2 = arith.andi %0, %1 : i1
    %3 = arith.extui %2 : i1 to i32
    %c0_i32_1 = arith.constant 0 : i32
    %4 = arith.cmpi ne, %3, %c0_i32_1 : i32
    scf.if %4 {
      %cst = arith.constant 0.000000e+00 : f32
      %11 = vector.broadcast %cst : f32 to vector<2x8x8xf32>
      %c0 = arith.constant 0 : index
      %c0_5 = arith.constant 0 : index
      %c0_6 = arith.constant 0 : index
      %12 = vector.load %arg8[%c0, %c0_5, %c0_6] : memref<2x8x8xf32, #tpu.memory_space<vmem>>, vector<2x8x8xf32>
      tpu.vector_store %arg8[%c0, %c0_5, %c0_6], %11 {strides = array<i32>} : memref<2x8x8xf32, #tpu.memory_space<vmem>>, vector<2x8x8xf32>,
      %cst_7 = arith.constant 0.000000e+00 : f32
      %13 = vector.broadcast %cst_7 : f32 to vector<2x8x8xf32>
      %c0_8 = arith.constant 0 : index
      %c0_9 = arith.constant 0 : index
      %c0_10 = arith.constant 0 : index
      %14 = vector.load %arg9[%c0_8, %c0_9, %c0_10] : memref<2x8x8xf32, #tpu.memory_space<vmem>>, vector<2x8x8xf32>
      tpu.vector_store %arg9[%c0_8, %c0_9, %c0_10], %13 {strides = array<i32>} : memref<2x8x8xf32, #tpu.memory_space<vmem>>, vector<2x8x8xf32>,
    } else {
    }
    %c0_i32_2 = arith.constant 0 : i32
    %5 = arith.cmpi eq, %arg1, %c0_i32_2 : i32
    %6 = arith.extui %5 : i1 to i32
    %c0_i32_3 = arith.constant 0 : i32
    %7 = arith.cmpi ne, %6, %c0_i32_3 : i32
    scf.if %7 {
      %c0 = arith.constant 0 : index
      %c0_5 = arith.constant 0 : index
      %c0_6 = arith.constant 0 : index
      %11 = vector.load %arg4[%c0, %c0_5, %c0_6] : memref<2x8x256xf32, #tpu.memory_space<vmem>>, vector<2x8x256xf32>
      %c0_7 = arith.constant 0 : index
      %c0_8 = arith.constant 0 : index
      %c0_9 = arith.constant 0 : index
      %12 = vector.load %arg5[%c0_7, %c0_8, %c0_9] : memref<2x8x256xf32, #tpu.memory_space<vmem>>, vector<2x8x256xf32>
      %c0_10 = arith.constant 0 : index
      %c0_11 = arith.constant 0 : index
      %c0_12 = arith.constant 0 : index
      %13 = vector.load %arg8[%c0_10, %c0_11, %c0_12] : memref<2x8x8xf32, #tpu.memory_space<vmem>>, vector<2x8x8xf32>
      "tpu.trace_start"() <{level = 10 : i32, message = "bcn,bdn->bcd"}> : () -> ()
      %cst = arith.constant dense<0.000000e+00> : vector<2x8x8xf32>
      %14 = tpu.matmul %11, %12, %cst {dimension_numbers = #tpu.dot_dimension_numbers<[2], [2], [1], [1], [0, 0, 0, 1, 1, 1], [0], [0]>} : vector<2x8x256xf32>, vector<2x8x256xf32>, vector<2x8x8xf32> -> vector<2x8x8xf32>
      "tpu.trace_stop"() : () -> ()
      %15 = arith.addf %13, %14 : vector<2x8x8xf32>
      %c0_13 = arith.constant 0 : index
      %c0_14 = arith.constant 0 : index
      %c0_15 = arith.constant 0 : index
      %16 = vector.load %arg8[%c0_13, %c0_14, %c0_15] : memref<2x8x8xf32, #tpu.memory_space<vmem>>, vector<2x8x8xf32>
      tpu.vector_store %arg8[%c0_13, %c0_14, %c0_15], %15 {strides = array<i32>} : memref<2x8x8xf32, #tpu.memory_space<vmem>>, vector<2x8x8xf32>,
      %c0_16 = arith.constant 0 : index
      %c0_17 = arith.constant 0 : index
      %c0_18 = arith.constant 0 : index
      %17 = vector.load %arg9[%c0_16, %c0_17, %c0_18] : memref<2x8x8xf32, #tpu.memory_space<vmem>>, vector<2x8x8xf32>
      "tpu.trace_start"() <{level = 10 : i32, message = "bcn,bdn->bcd"}> : () -> ()
      %cst_19 = arith.constant dense<0.000000e+00> : vector<2x8x8xf32>
      %18 = tpu.matmul %12, %11, %cst_19 {dimension_numbers = #tpu.dot_dimension_numbers<[2], [2], [1], [1], [0, 0, 0, 1, 1, 1], [0], [0]>} : vector<2x8x256xf32>, vector<2x8x256xf32>, vector<2x8x8xf32> -> vector<2x8x8xf32>
      "tpu.trace_stop"() : () -> ()
      %19 = arith.addf %17, %18 : vector<2x8x8xf32>
      %c0_20 = arith.constant 0 : index
      %c0_21 = arith.constant 0 : index
      %c0_22 = arith.constant 0 : index
      %20 = vector.load %arg9[%c0_20, %c0_21, %c0_22] : memref<2x8x8xf32, #tpu.memory_space<vmem>>, vector<2x8x8xf32>
      tpu.vector_store %arg9[%c0_20, %c0_21, %c0_22], %19 {strides = array<i32>} : memref<2x8x8xf32, #tpu.memory_space<vmem>>, vector<2x8x8xf32>,
    } else {
    }
    %c1_i32 = arith.constant 1 : i32
    %8 = arith.cmpi eq, %arg1, %c1_i32 : i32
    %9 = arith.extui %8 : i1 to i32
    %c0_i32_4 = arith.constant 0 : i32
    %10 = arith.cmpi ne, %9, %c0_i32_4 : i32
    scf.if %10 {
      %c0_i32_5 = arith.constant 0 : i32
      %11 = arith.cmpi eq, %arg2, %c0_i32_5 : i32
      %12 = arith.extui %11 : i1 to i32
      %c0_i32_6 = arith.constant 0 : i32
      %13 = arith.cmpi ne, %12, %c0_i32_6 : i32
      scf.if %13 {
        %c0_26 = arith.constant 0 : index
        %c0_27 = arith.constant 0 : index
        %c0_28 = arith.constant 0 : index
        %29 = vector.load %arg8[%c0_26, %c0_27, %c0_28] : memref<2x8x8xf32, #tpu.memory_space<vmem>>, vector<2x8x8xf32>
        %cst_29 = arith.constant dense<0x7F800000> : vector<2x8xf32>
        %30 = vector.multi_reduction <minimumf>, %29, %cst_29 [2] : vector<2x8x8xf32> to vector<2x8xf32>
        %31 = vector.shape_cast %30 : vector<2x8xf32> to vector<2x8x1xf32>
        %32 = vector.broadcast %31 : vector<2x8x1xf32> to vector<2x8x8xf32>
        %33 = arith.subf %32, %29 : vector<2x8x8xf32>
        %34 = math.exp %33 : vector<2x8x8xf32>
        %cst_30 = arith.constant dense<0.000000e+00> : vector<2x8xf32>
        %35 = vector.multi_reduction <add>, %34, %cst_30 [2] : vector<2x8x8xf32> to vector<2x8xf32>
        %36 = vector.shape_cast %35 : vector<2x8xf32> to vector<2x8x1xf32>
        %37 = tpu.reciprocal %36 {approx = true} : vector<2x8x1xf32> -> vector<2x8x1xf32>
        %38 = vector.broadcast %37 : vector<2x8x1xf32> to vector<2x8x8xf32>
        %39 = arith.mulf %34, %38 : vector<2x8x8xf32>
        %c0_31 = arith.constant 0 : index
        %c0_32 = arith.constant 0 : index
        %c0_33 = arith.constant 0 : index
        %40 = vector.load %arg8[%c0_31, %c0_32, %c0_33] : memref<2x8x8xf32, #tpu.memory_space<vmem>>, vector<2x8x8xf32>
        tpu.vector_store %arg8[%c0_31, %c0_32, %c0_33], %39 {strides = array<i32>} : memref<2x8x8xf32, #tpu.memory_space<vmem>>, vector<2x8x8xf32>,
        %c0_34 = arith.constant 0 : index
        %c0_35 = arith.constant 0 : index
        %c0_36 = arith.constant 0 : index
        %41 = vector.load %arg9[%c0_34, %c0_35, %c0_36] : memref<2x8x8xf32, #tpu.memory_space<vmem>>, vector<2x8x8xf32>
        %cst_37 = arith.constant dense<0x7F800000> : vector<2x8xf32>
        %42 = vector.multi_reduction <minimumf>, %41, %cst_37 [2] : vector<2x8x8xf32> to vector<2x8xf32>
        %43 = vector.shape_cast %42 : vector<2x8xf32> to vector<2x8x1xf32>
        %44 = vector.broadcast %43 : vector<2x8x1xf32> to vector<2x8x8xf32>
        %45 = arith.subf %44, %41 : vector<2x8x8xf32>
        %46 = math.exp %45 : vector<2x8x8xf32>
        %cst_38 = arith.constant dense<0.000000e+00> : vector<2x8xf32>
        %47 = vector.multi_reduction <add>, %46, %cst_38 [2] : vector<2x8x8xf32> to vector<2x8xf32>
        %48 = vector.shape_cast %47 : vector<2x8xf32> to vector<2x8x1xf32>
        %49 = tpu.reciprocal %48 {approx = true} : vector<2x8x1xf32> -> vector<2x8x1xf32>
        %50 = vector.broadcast %49 : vector<2x8x1xf32> to vector<2x8x8xf32>
        %51 = arith.mulf %46, %50 : vector<2x8x8xf32>
        %c0_39 = arith.constant 0 : index
        %c0_40 = arith.constant 0 : index
        %c0_41 = arith.constant 0 : index
        %52 = vector.load %arg9[%c0_39, %c0_40, %c0_41] : memref<2x8x8xf32, #tpu.memory_space<vmem>>, vector<2x8x8xf32>
        tpu.vector_store %arg9[%c0_39, %c0_40, %c0_41], %51 {strides = array<i32>} : memref<2x8x8xf32, #tpu.memory_space<vmem>>, vector<2x8x8xf32>,
      } else {
      }
      %c0 = arith.constant 0 : index
      %14 = memref.load %arg3[%c0] : memref<1xf32, #tpu.memory_space<smem>>
      %c0_7 = arith.constant 0 : index
      %c0_8 = arith.constant 0 : index
      %c0_9 = arith.constant 0 : index
      %15 = vector.load %arg4[%c0_7, %c0_8, %c0_9] : memref<2x8x256xf32, #tpu.memory_space<vmem>>, vector<2x8x256xf32>
      %c0_10 = arith.constant 0 : index
      %c0_11 = arith.constant 0 : index
      %c0_12 = arith.constant 0 : index
      %16 = vector.load %arg5[%c0_10, %c0_11, %c0_12] : memref<2x8x256xf32, #tpu.memory_space<vmem>>, vector<2x8x256xf32>
      %c0_13 = arith.constant 0 : index
      %c0_14 = arith.constant 0 : index
      %c0_15 = arith.constant 0 : index
      %17 = vector.load %arg8[%c0_13, %c0_14, %c0_15] : memref<2x8x8xf32, #tpu.memory_space<vmem>>, vector<2x8x8xf32>
      "tpu.trace_start"() <{level = 10 : i32, message = "bcd,bdn->bcn"}> : () -> ()
      %cst = arith.constant dense<0.000000e+00> : vector<2x8x256xf32>
      %18 = tpu.matmul %17, %15, %cst {dimension_numbers = #tpu.dot_dimension_numbers<[2], [1], [1], [2], [0, 0, 0, 1, 1, 2], [0], [0]>} : vector<2x8x8xf32>, vector<2x8x256xf32>, vector<2x8x256xf32> -> vector<2x8x256xf32>
      "tpu.trace_stop"() : () -> ()
      %c0_16 = arith.constant 0 : index
      %c0_17 = arith.constant 0 : index
      %c0_18 = arith.constant 0 : index
      %19 = vector.load %arg9[%c0_16, %c0_17, %c0_18] : memref<2x8x8xf32, #tpu.memory_space<vmem>>, vector<2x8x8xf32>
      "tpu.trace_start"() <{level = 10 : i32, message = "bcd,bdn->bcn"}> : () -> ()
      %cst_19 = arith.constant dense<0.000000e+00> : vector<2x8x256xf32>
      %20 = tpu.matmul %19, %16, %cst_19 {dimension_numbers = #tpu.dot_dimension_numbers<[2], [1], [1], [2], [0, 0, 0, 1, 1, 2], [0], [0]>} : vector<2x8x8xf32>, vector<2x8x256xf32>, vector<2x8x256xf32> -> vector<2x8x256xf32>
      "tpu.trace_stop"() : () -> ()
      %21 = vector.broadcast %14 : f32 to vector<2x8x256xf32>
      %22 = arith.mulf %21, %18 : vector<2x8x256xf32>
      %23 = arith.addf %22, %15 : vector<2x8x256xf32>
      %c0_20 = arith.constant 0 : index
      %c0_21 = arith.constant 0 : index
      %c0_22 = arith.constant 0 : index
      %24 = vector.load %arg6[%c0_20, %c0_21, %c0_22] : memref<2x8x256xf32, #tpu.memory_space<vmem>>, vector<2x8x256xf32>
      tpu.vector_store %arg6[%c0_20, %c0_21, %c0_22], %23 {strides = array<i32>} : memref<2x8x256xf32, #tpu.memory_space<vmem>>, vector<2x8x256xf32>,
      %25 = vector.broadcast %14 : f32 to vector<2x8x256xf32>
      %26 = arith.mulf %25, %20 : vector<2x8x256xf32>
      %27 = arith.addf %26, %16 : vector<2x8x256xf32>
      %c0_23 = arith.constant 0 : index
      %c0_24 = arith.constant 0 : index
      %c0_25 = arith.constant 0 : index
      %28 = vector.load %arg7[%c0_23, %c0_24, %c0_25] : memref<2x8x256xf32, #tpu.memory_space<vmem>>, vector<2x8x256xf32>
      tpu.vector_store %arg7[%c0_23, %c0_24, %c0_25], %27 {strides = array<i32>} : memref<2x8x256xf32, #tpu.memory_space<vmem>>, vector<2x8x256xf32>,
    } else {
    }
    return
  }
  func.func @transform_0(%arg0: i32, %arg1: i32, %arg2: i32) -> i32 {
    %c0_i32 = arith.constant 0 : i32
    %c0_i32_0 = arith.constant 0 : i32
    return %c0_i32 : i32
  }
  func.func @transform_1(%arg0: i32, %arg1: i32, %arg2: i32) -> (i32, i32, i32) {
    %c0_i32 = arith.constant 0 : i32
    %c0_i32_0 = arith.constant 0 : i32
    return %arg0, %c0_i32, %arg2 : i32, i32, i32
  }
  func.func @transform_2(%arg0: i32, %arg1: i32, %arg2: i32) -> (i32, i32, i32) {
    %c0_i32 = arith.constant 0 : i32
    %c0_i32_0 = arith.constant 0 : i32
    return %arg0, %c0_i32, %arg2 : i32, i32, i32
  }
  func.func @transform_3(%arg0: i32, %arg1: i32, %arg2: i32) -> (i32, i32, i32) {
    %0 = arith.muli %arg1, %arg2 : i32
    %c0_i32 = arith.constant 0 : i32
    %c0_i32_0 = arith.constant 0 : i32
    return %arg0, %c0_i32, %0 : i32, i32, i32
  }
  func.func @transform_4(%arg0: i32, %arg1: i32, %arg2: i32) -> (i32, i32, i32) {
    %0 = arith.muli %arg1, %arg2 : i32
    %c0_i32 = arith.constant 0 : i32
    %c0_i32_0 = arith.constant 0 : i32
    return %arg0, %c0_i32, %0 : i32, i32, i32
  }
}

</mosaic_0001>

<llo_original>
// kernel: tpu_custom_call.1
$region0: #{tpu_custom_call.1}
  #allocation0 [shape = 'u32[]', space=smem, size = 0x4, offset = 0x4, fixed_abs, tag = 'smem constant byte address 0x4 - core index']
  #allocation1 [shape = 'u32[144,128]{1,0:T(1,128)}', space=vmem, size = 0x12000, scoped, tag = 'internal scratch']
  #allocation2 [shape = 'f32[2,8,8]{2,1,0:T(8,128)}', space=vmem, size = 0x2000, scoped, tag = 'scratch operand']
  #allocation3 [shape = 'f32[2,8,8]{2,1,0:T(8,128)}', space=vmem, size = 0x2000, scoped, tag = 'scratch operand']
  #allocation4 [shape = 'f32[1]{0:T(128)S(6)}', space=smem, size = 0x200, scoped, tag = 'scoped memory for tpu_custom_call.1']
  %s0 = inlined_call_operand.<no memory space> [shape: f32[1], index: 0, kind: input, shape index: {}]
  %s1 = inlined_call_operand.hbm [shape: f32[2,8,256], index: 1, kind: input, shape index: {}]
  %s2 = inlined_call_operand.hbm [shape: f32[2,8,256], index: 2, kind: input, shape index: {}]
  %s3 = inlined_call_operand.hbm [shape: f32[2,8,256], index: 3, kind: output, shape index: {0}]
  %s4 = inlined_call_operand.hbm [shape: f32[2,8,256], index: 4, kind: output, shape index: {1}]
  %5 = xla_tuple %s3, %s4
  %s6 = sld [smem:[#allocation0]]
  $region77: #{tpu_custom_call.1} parent=0
    _
  %s8 = ssub.s32 1, %s6
  %s9 = scalar_select 0, %s8, %s6
  %10 = sst [smem:[#allocation4]] %s0
  $region1: #{tpu_custom_call.1} parent=0
    #allocation5 [shape = 'u8[16384]{0}', space=vmem, size = 0x4000, scoped, tag = 'input window, operand 1, single buffered']
    #allocation6 [shape = 's32[2]{0}', space=sflag, size = 0x8, scoped, tag = 'scoped memory for tpu_custom_call.1']
    #allocation7 [shape = 's32[2]{0}', space=sflag, size = 0x8, scoped, tag = 'scoped memory for tpu_custom_call.1']
    #allocation8 [shape = 'u8[16384]{0}', space=vmem, size = 0x4000, scoped, tag = 'input window, operand 2, single buffered']
    #allocation9 [shape = 's32[1]{0}', space=sflag, size = 0x4, scoped, tag = 'scoped memory for tpu_custom_call.1']
    #allocation10 [shape = 'u8[32768]{0}', space=vmem, size = 0x8000, scoped, tag = 'output window, operand 0']
    #allocation11 [shape = 'u8[32768]{0}', space=vmem, size = 0x8000, scoped, tag = 'output window, operand 1']
    #allocation12 [shape = 's32[2]{0}', space=sflag, size = 0x8, scoped, tag = 'scoped memory for tpu_custom_call.1']
    %11 = vsyncpa [#allocation6], 0
    %12 = vsyncpa [#allocation9], 0
    %13 = vsyncpa [#allocation7], 0
    %s14 = scalar_lea.sflag [#allocation7], 1
    %15 = vsyncpa %s14, 0
    %16 = vsyncpa [#allocation12], 0
    %s17 = scalar_lea.sflag [#allocation12], 1
    %18 = vsyncpa %s17, 0
    loop: start=0, step=1, limit=4
    $region2: #{tpu_custom_call.1} parent=1 // loop_pre_header
      _
    $region3: #{tpu_custom_call.1} parent=1 // loop_header
      %s20 = sphi 0, %s24
      %p21 = scmp.ge.s32.totalorder %s20, 4
      %s27 = sphi 0, %s46
      %s28 = sphi 0, %s42
      %s29 = sphi 0, %s38
      %s30 = sphi 0, %s27
      %s31 = sphi 0, %s28
      %s32 = sphi 0, %s29
      %s33 = sphi 0, %s30
      %s34 = sphi 0, %s31
      %s35 = sphi 0, %s32
      %s47 = sphi 0, %s47
      %s49 = sphi 0, %s47
      %s50 = sphi 0, %s49
      %s64 = sphi 0, %s50
      %s72 = sphi 0, %s74
      %s75 = sphi 0, %s72
      %s76 = sphi 0, %s75
      %s92 = sphi 0, %s76
      %s100 = sphi 0, %s102
      %s103 = sphi 0, %s100
      %s104 = sphi 0, %s103
      %s120 = sphi 0, %s104
      %s130 = sphi 0, %s132
      %s133 = sphi 0, %s130
      %s134 = sphi 0, %s133
      %s150 = sphi 0, %s134
      %s160 = sphi 0, %s162
      %s163 = sphi 0, %s160
      %s164 = sphi 0, %s163
      %s180 = sphi 0, %s164
    $region4: #{tpu_custom_call.1} parent=1 // loop_header_branch
      %23 = sbr.rel (%p21) target = $region8
    $region5: #{tpu_custom_call.1} parent=1 // loop_body
      %s25 = ssub.s32 %s20, 1
      %s26 = ssub.s32 %s20, 2
      %s36 = sadd.s32 1, %s29
      %p37 = scmp.ge.s32.totalorder %s36, 1
      %s38 = scalar_select %p37, 0, %s36
      %s39 = sadd.s32 1, %s28
      %s40 = scalar_select %p37, %s39, %s28
      %p41 = scmp.ge.s32.totalorder %s40, 2
      %s42 = scalar_select %p41, 0, %s40
      %s43 = sadd.s32 1, %s27
      %s44 = scalar_select %p41, %s43, %s27
      %p45 = scmp.ge.s32.totalorder %s44, 1
      %s46 = scalar_select %p45, 0, %s44
      %s48 = sadd.s32 %s47, 1
      %p51 = scmp.eq.s32.totalorder %s20, 1
      %p52 = scmp.ne.s32.totalorder %s47, %s49
      %p53 = scmp.eq.s32.totalorder %s20, 0
      %p54 = por %p52, %p53
      %p55 = scmp.ne.s32.totalorder %s47, %s49
      %p56 = scmp.eq.s32.totalorder %s25, 1
      %p57 = por %p55, %p56
      %p58 = scmp.ne.s32.totalorder %s49, %s50
      %p59 = scmp.eq.s32.totalorder %s25, 0
      %p60 = por %p58, %p59
      %p61 = scmp.ne.s32.totalorder %s49, %s50
      %p62 = scmp.eq.s32.totalorder %s26, 1
      %p63 = por %p61, %p62
      %p65 = scmp.ne.s32.totalorder %s50, %s64
      %p66 = scmp.eq.s32.totalorder %s26, 0
      %p67 = por %p65, %p66
      %s68 = ssub.s32 %s27, %s46
      %s69 = ssub.s32 %s29, %s38
      %s70 = sor.u32 %s68, %s69
      %p71 = scmp.eq.s32.totalorder %s70, 0
      %s73 = sadd.s32 %s72, 1
      %s74 = scalar_select %p71, %s72, %s73
      %p77 = pneg %p71
      %p78 = scmp.eq.s32.totalorder %s20, 1
      %p79 = por %p77, %p78
      %p80 = scmp.ne.s32.totalorder %s72, %s75
      %p81 = scmp.eq.s32.totalorder %s20, 0
      %p82 = por %p80, %p81
      %p83 = scmp.ne.s32.totalorder %s72, %s75
      %p84 = scmp.eq.s32.totalorder %s25, 1
      %p85 = por %p83, %p84
      %p86 = scmp.ne.s32.totalorder %s75, %s76
      %p87 = scmp.eq.s32.totalorder %s25, 0
      %p88 = por %p86, %p87
      %p89 = scmp.ne.s32.totalorder %s75, %s76
      %p90 = scmp.eq.s32.totalorder %s26, 1
      %p91 = por %p89, %p90
      %p93 = scmp.ne.s32.totalorder %s76, %s92
      %p94 = scmp.eq.s32.totalorder %s26, 0
      %p95 = por %p93, %p94
      %s96 = ssub.s32 %s27, %s46
      %s97 = ssub.s32 %s29, %s38
      %s98 = sor.u32 %s96, %s97
      %p99 = scmp.eq.s32.totalorder %s98, 0
      %s101 = sadd.s32 %s100, 1
      %s102 = scalar_select %p99, %s100, %s101
      %p105 = pneg %p99
      %p106 = scmp.eq.s32.totalorder %s20, 1
      %p107 = por %p105, %p106
      %p108 = scmp.ne.s32.totalorder %s100, %s103
      %p109 = scmp.eq.s32.totalorder %s20, 0
      %p110 = por %p108, %p109
      %p111 = scmp.ne.s32.totalorder %s100, %s103
      %p112 = scmp.eq.s32.totalorder %s25, 1
      %p113 = por %p111, %p112
      %p114 = scmp.ne.s32.totalorder %s103, %s104
      %p115 = scmp.eq.s32.totalorder %s25, 0
      %p116 = por %p114, %p115
      %p117 = scmp.ne.s32.totalorder %s103, %s104
      %p118 = scmp.eq.s32.totalorder %s26, 1
      %p119 = por %p117, %p118
      %p121 = scmp.ne.s32.totalorder %s104, %s120
      %p122 = scmp.eq.s32.totalorder %s26, 0
      %p123 = por %p121, %p122
      %s124 = smul.u32 %s28, %s29
      %s125 = smul.u32 %s42, %s38
      %s126 = ssub.s32 %s27, %s46
      %s127 = ssub.s32 %s124, %s125
      %s128 = sor.u32 %s126, %s127
      %p129 = scmp.eq.s32.totalorder %s128, 0
      %s131 = sadd.s32 %s130, 1
      %s132 = scalar_select %p129, %s130, %s131
      %p135 = pneg %p129
      %p136 = scmp.eq.s32.totalorder %s20, 1
      %p137 = por %p135, %p136
      %p138 = scmp.ne.s32.totalorder %s130, %s133
      %p139 = scmp.eq.s32.totalorder %s20, 0
      %p140 = por %p138, %p139
      %p141 = scmp.ne.s32.totalorder %s130, %s133
      %p142 = scmp.eq.s32.totalorder %s25, 1
      %p143 = por %p141, %p142
      %p144 = scmp.ne.s32.totalorder %s133, %s134
      %p145 = scmp.eq.s32.totalorder %s25, 0
      %p146 = por %p144, %p145
      %p147 = scmp.ne.s32.totalorder %s133, %s134
      %p148 = scmp.eq.s32.totalorder %s26, 1
      %p149 = por %p147, %p148
      %p151 = scmp.ne.s32.totalorder %s134, %s150
      %p152 = scmp.eq.s32.totalorder %s26, 0
      %p153 = por %p151, %p152
      %s154 = smul.u32 %s28, %s29
      %s155 = smul.u32 %s42, %s38
      %s156 = ssub.s32 %s27, %s46
      %s157 = ssub.s32 %s154, %s155
      %s158 = sor.u32 %s156, %s157
      %p159 = scmp.eq.s32.totalorder %s158, 0
      %s161 = sadd.s32 %s160, 1
      %s162 = scalar_select %p159, %s160, %s161
      %p165 = pneg %p159
      %p166 = scmp.eq.s32.totalorder %s20, 1
      %p167 = por %p165, %p166
      %p168 = scmp.ne.s32.totalorder %s160, %s163
      %p169 = scmp.eq.s32.totalorder %s20, 0
      %p170 = por %p168, %p169
      %p171 = scmp.ne.s32.totalorder %s160, %s163
      %p172 = scmp.eq.s32.totalorder %s25, 1
      %p173 = por %p171, %p172
      %p174 = scmp.ne.s32.totalorder %s163, %s164
      %p175 = scmp.eq.s32.totalorder %s25, 0
      %p176 = por %p174, %p175
      %p177 = scmp.ne.s32.totalorder %s163, %s164
      %p178 = scmp.eq.s32.totalorder %s26, 1
      %p179 = por %p177, %p178
      %p181 = scmp.ne.s32.totalorder %s164, %s180
      %p182 = scmp.eq.s32.totalorder %s26, 0
      %p183 = por %p181, %p182
      %p184 = scmp.le.s32.totalorder 1, %s20
      %p185 = scmp.lt.s32.totalorder %s20, 3
      %p186 = pnand %p184, %p185
      %p187 = pneg %p186
      // Predicated region
      $region9: #{tpu_custom_call.1} parent=5 // pred_check
        _
      $region10: #{tpu_custom_call.1} parent=5 // pred_check_branch
        %189 = sbr.rel (%p186) target = $region12
      $region11: #{tpu_custom_call.1} parent=5 // pred_region
        %s190 = ssub.s32 %s20, 1
        // Predicated region
        $region13: #{tpu_custom_call.1} parent=11 // pred_check
          %p191 = pneg %p60
        $region14: #{tpu_custom_call.1} parent=11 // pred_check_branch
          %193 = sbr.rel (%p191) target = $region16
        $region15: #{tpu_custom_call.1} parent=11 // pred_region
          _
        $region16: #{tpu_custom_call.1} parent=11 // pred_fallthru
          _
        // Predicated region
        $region17: #{tpu_custom_call.1} parent=11 // pred_check
          %p194 = pneg %p88
        $region18: #{tpu_custom_call.1} parent=11 // pred_check_branch
          %196 = sbr.rel (%p194) target = $region20
        $region19: #{tpu_custom_call.1} parent=11 // pred_region
          %s197 = smul.u32 2, %s30
          %s198 = smul.u32 2, %s32
          %s200 = ssub.s32 512, 512
          %201 = vsyncadd [#allocation6], %s200
          %s202 = smul.addr %s197, 2
          %s203 = sadd.s32 %s198, %s202
          %s204 = smul.addr %s203, 128
          %s205 = scalar_lea.hbm %s1, %s204
          %s206 = sshll.u32 [#allocation5], 4
          %s207 = int_to_ptr.vmem [resolvable:$true] %s206
          %212 = dma.hbm_to_vmem [thread:$0]  %s205, 512, %s207, [#allocation6], 256, 256, 16
        $region20: #{tpu_custom_call.1} parent=11 // pred_fallthru
          _
        // Predicated region
        $region21: #{tpu_custom_call.1} parent=11 // pred_check
          %p213 = pneg %p116
        $region22: #{tpu_custom_call.1} parent=11 // pred_check_branch
          %215 = sbr.rel (%p213) target = $region24
        $region23: #{tpu_custom_call.1} parent=11 // pred_region
          %s216 = smul.u32 2, %s30
          %s217 = smul.u32 2, %s32
          %s219 = ssub.s32 512, 512
          %220 = vsyncadd [#allocation9], %s219
          %s221 = smul.addr %s216, 2
          %s222 = sadd.s32 %s217, %s221
          %s223 = smul.addr %s222, 128
          %s224 = scalar_lea.hbm %s2, %s223
          %s225 = sshll.u32 [#allocation8], 4
          %s226 = int_to_ptr.vmem [resolvable:$true] %s225
          %231 = dma.hbm_to_vmem [thread:$0]  %s224, 512, %s226, [#allocation9], 256, 256, 16
        $region24: #{tpu_custom_call.1} parent=11 // pred_fallthru
          _
      $region12: #{tpu_custom_call.1} parent=5 // pred_fallthru
        _
      %p232 = scmp.lt.s32.totalorder %s20, 2
      // Predicated region
      $region25: #{tpu_custom_call.1} parent=5 // pred_check
        %p233 = pneg %p232
      $region26: #{tpu_custom_call.1} parent=5 // pred_check_branch
        %235 = sbr.rel (%p233) target = $region28
      $region27: #{tpu_custom_call.1} parent=5 // pred_region
        _
      $region28: #{tpu_custom_call.1} parent=5 // pred_fallthru
        _
      %p236 = scmp.le.s32.totalorder 1, %s20
      %p237 = scmp.lt.s32.totalorder %s20, 3
      %p238 = pnand %p236, %p237
      %p239 = pneg %p238
      // Predicated region
      $region29: #{tpu_custom_call.1} parent=5 // pred_check
        _
      $region30: #{tpu_custom_call.1} parent=5 // pred_check_branch
        %241 = sbr.rel (%p238) target = $region32
      $region31: #{tpu_custom_call.1} parent=5 // pred_region
        %s242 = ssub.s32 %s20, 1
        // Predicated region
        $region33: #{tpu_custom_call.1} parent=31 // pred_check
          %p243 = pneg %p88
        $region34: #{tpu_custom_call.1} parent=31 // pred_check_branch
          %245 = sbr.rel (%p243) target = $region36
        $region35: #{tpu_custom_call.1} parent=31 // pred_region
          %246 = dma.done [#allocation6], 512
        $region36: #{tpu_custom_call.1} parent=31 // pred_fallthru
          _
        // Predicated region
        $region37: #{tpu_custom_call.1} parent=31 // pred_check
          %p247 = pneg %p116
        $region38: #{tpu_custom_call.1} parent=31 // pred_check_branch
          %249 = sbr.rel (%p247) target = $region40
        $region39: #{tpu_custom_call.1} parent=31 // pred_region
          %250 = dma.done [#allocation9], 512
        $region40: #{tpu_custom_call.1} parent=31 // pred_fallthru
          _
        %p251 = pneg %p60
        %p252 = pneg %p57
        %p253 = pneg %p88
        %p254 = pneg %p85
        %p255 = pneg %p116
        %p256 = pneg %p113
        %p257 = pneg %p146
        %p258 = pneg %p143
        %s259 = sand.u32 %s133, 1
        %s260 = scalar_lea.sflag [#allocation7], %s259
        %s261 = sand.u32 %s133, 1
        %s262 = smul.addr %s261, 32
        %s263 = scalar_lea.vmem [#allocation10], %s262
        %p264 = pneg %p176
        %p265 = pneg %p173
        %s266 = sand.u32 %s163, 1
        %s267 = scalar_lea.sflag [#allocation12], %s266
        %s268 = sand.u32 %s163, 1
        %s269 = smul.addr %s268, 32
        %s270 = scalar_lea.vmem [#allocation11], %s269
        %s271 = smul.u32 2, %s30
        %s272 = smul.u32 2, %s32
        %s273 = smul.u32 2, %s30
        %s274 = smul.u32 2, %s32
        %s275 = smul.u32 %s31, %s32
        %s276 = smul.u32 2, %s30
        %s277 = smul.u32 2, %s275
        %s278 = smul.u32 %s31, %s32
        %s279 = smul.u32 2, %s30
        %s280 = smul.u32 2, %s278
        %p281 = scmp.eq.s32.totalorder %s31, 0
        %p282 = scmp.eq.s32.totalorder %s32, 0
        %p283 = pnand %p281, %p282
        %p284 = pneg %p283
        // Predicated region
        $region41: #{tpu_custom_call.1} parent=31 // pred_check
          _
        $region42: #{tpu_custom_call.1} parent=31 // pred_check_branch
          %286 = sbr.rel (%p283) target = $region44
        $region43: #{tpu_custom_call.1} parent=31 // pred_region
          %vm287 = vcmask 64512
          %288 = vst.msk [vmem:[#allocation2] sm:$0xff] %vm287, 0.0
          %289 = vst.msk [vmem:[#allocation2 + $0x8] sm:$0xff] %vm287, 0.0
          %290 = vst.msk [vmem:[#allocation3] sm:$0xff] %vm287, 0.0
          %291 = vst.msk [vmem:[#allocation3 + $0x8] sm:$0xff] %vm287, 0.0
        $region44: #{tpu_custom_call.1} parent=31 // pred_fallthru
          _
        // Predicated region
        $region45: #{tpu_custom_call.1} parent=31 // pred_check
          %p292 = pneg %p281
        $region46: #{tpu_custom_call.1} parent=31 // pred_check_branch
          %294 = sbr.rel (%p292) target = $region48
        $region47: #{tpu_custom_call.1} parent=31 // pred_region
          %v295 = vld [vmem:[#allocation5] sm:$0xff]
          %v296 = vld [vmem:[#allocation5 + $0x8] sm:$0xff]
          %v297 = vld [vmem:[#allocation5 + $0x10] sm:$0xff]
          %v298 = vld [vmem:[#allocation5 + $0x18] sm:$0xff]
          %v299 = vld [vmem:[#allocation8] sm:$0xff]
          %v300 = vld [vmem:[#allocation8 + $0x8] sm:$0xff]
          %v301 = vld [vmem:[#allocation8 + $0x10] sm:$0xff]
          %v302 = vld [vmem:[#allocation8 + $0x18] sm:$0xff]
          %v303 = vld [vmem:[#allocation2] sm:$0xff]
          %v304 = vld [vmem:[#allocation2 + $0x8] sm:$0xff]
          %305 = vmatprep.subr.mxu0 %v300
          %306 = vmatpush1.xpose.msra.mxu0 %v299
          %307 = vmatprep.subr.mxu0 0.0
          %308 = vmatpush1.xpose.msra.mxu0 0.0
          %309 = vmatprep.subr.mxu0 0.0
          %310 = vmatpush1.xpose.msra.mxu0 0.0
          %311 = vmatprep.subr.mxu0 0.0
          %312 = vmatpush1.xpose.msra.mxu0 0.0
          %313 = vmatprep.subr.mxu0 0.0
          %314 = vmatpush1.xpose.msra.mxu0 0.0
          %315 = vmatprep.subr.mxu0 0.0
          %316 = vmatpush1.xpose.msra.mxu0 0.0
          %317 = vmatprep.subr.mxu0 0.0
          %318 = vmatpush1.xpose.msra.mxu0 0.0
          %319 = vmatprep.subr.mxu0 0.0
          %320 = vmatpush1.xpose.msra.mxu0 0.0
          %321 = vmatprep.subr.mxu0 0.0
          %322 = vmatpush1.xpose.msra.mxu0 0.0
          %323 = vmatprep.subr.mxu0 0.0
          %324 = vmatpush1.xpose.msra.mxu0 0.0
          %325 = vmatprep.subr.mxu0 0.0
          %326 = vmatpush1.xpose.msra.mxu0 0.0
          %327 = vmatprep.subr.mxu0 0.0
          %328 = vmatpush1.xpose.msra.mxu0 0.0
          %329 = vmatprep.subr.mxu0 0.0
          %330 = vmatpush1.xpose.msra.mxu0 0.0
          %331 = vmatprep.subr.mxu0 0.0
          %332 = vmatpush1.xpose.msra.mxu0 0.0
          %333 = vmatprep.subr.mxu0 0.0
          %334 = vmatpush1.xpose.msra.mxu0 0.0
          %335 = vmatprep.subr.mxu0 0.0
          %336 = vmatpush1.xpose.msra.mxu0 0.0
          %337 = vmatprep.subr.mxu0 0.0
          %338 = vmatpush1.xpose.msra.mxu0 0.0
          %339 = vmatprep.subr.mxu0 0.0
          %340 = vmatpush1.xpose.msra.mxu0 0.0
          %341 = vmatprep.subr.mxu0 0.0
          %342 = vmatpush1.xpose.msra.mxu0 0.0
          %343 = vmatprep.subr.mxu0 0.0
          %344 = vmatpush1.xpose.msra.mxu0 0.0
          %345 = vmatprep.subr.mxu0 0.0
          %346 = vmatpush1.xpose.msra.mxu0 0.0
          %347 = vmatprep.subr.mxu0 0.0
          %348 = vmatpush1.xpose.msra.mxu0 0.0
          %349 = vmatprep.subr.mxu0 0.0
          %350 = vmatpush1.xpose.msra.mxu0 0.0
          %351 = vmatprep.subr.mxu0 0.0
          %352 = vmatpush1.xpose.msra.mxu0 0.0
          %353 = vmatprep.subr.mxu0 0.0
          %354 = vmatpush1.xpose.msra.mxu0 0.0
          %355 = vmatprep.subr.mxu0 0.0
          %356 = vmatpush1.xpose.msra.mxu0 0.0
          %357 = vmatprep.subr.mxu0 0.0
          %358 = vmatpush1.xpose.msra.mxu0 0.0
          %359 = vmatprep.subr.mxu0 0.0
          %360 = vmatpush1.xpose.msra.mxu0 0.0
          %361 = vmatprep.subr.mxu0 0.0
          %362 = vmatpush1.xpose.msra.mxu0 0.0
          %363 = vmatprep.subr.mxu0 0.0
          %364 = vmatpush1.xpose.msra.mxu0 0.0
          %365 = vmatprep.subr.mxu0 0.0
          %366 = vmatpush1.xpose.msra.mxu0 0.0
          %367 = vmatprep.subr.mxu0 0.0
          %368 = vmatpush1.xpose.msra.mxu0 0.0
          %369 = vmatprep.mubr.f32.mxu0 %v296
          %370 = vmatmul.mubr.f32.gmra.mrb[0].mxu0 %v295
          %v371 = vpop.f32.mrb[0].mxu0
          %v372 = vadd.f32 0.0, %v371
          %v373 = vpop.f32.mrb[0].mxu0
          %374 = vdwg.mxu0
          %375 = vmatprep.subr.mxu0 %v302
          %376 = vmatpush1.xpose.msra.mxu0 %v301
          %377 = vmatprep.subr.mxu0 0.0
          %378 = vmatpush1.xpose.msra.mxu0 0.0
          %379 = vmatprep.subr.mxu0 0.0
          %380 = vmatpush1.xpose.msra.mxu0 0.0
          %381 = vmatprep.subr.mxu0 0.0
          %382 = vmatpush1.xpose.msra.mxu0 0.0
          %383 = vmatprep.subr.mxu0 0.0
          %384 = vmatpush1.xpose.msra.mxu0 0.0
          %385 = vmatprep.subr.mxu0 0.0
          %386 = vmatpush1.xpose.msra.mxu0 0.0
          %387 = vmatprep.subr.mxu0 0.0
          %388 = vmatpush1.xpose.msra.mxu0 0.0
          %389 = vmatprep.subr.mxu0 0.0
          %390 = vmatpush1.xpose.msra.mxu0 0.0
          %391 = vmatprep.subr.mxu0 0.0
          %392 = vmatpush1.xpose.msra.mxu0 0.0
          %393 = vmatprep.subr.mxu0 0.0
          %394 = vmatpush1.xpose.msra.mxu0 0.0
          %395 = vmatprep.subr.mxu0 0.0
          %396 = vmatpush1.xpose.msra.mxu0 0.0
          %397 = vmatprep.subr.mxu0 0.0
          %398 = vmatpush1.xpose.msra.mxu0 0.0
          %399 = vmatprep.subr.mxu0 0.0
          %400 = vmatpush1.xpose.msra.mxu0 0.0
          %401 = vmatprep.subr.mxu0 0.0
          %402 = vmatpush1.xpose.msra.mxu0 0.0
          %403 = vmatprep.subr.mxu0 0.0
          %404 = vmatpush1.xpose.msra.mxu0 0.0
          %405 = vmatprep.subr.mxu0 0.0
          %406 = vmatpush1.xpose.msra.mxu0 0.0
          %407 = vmatprep.subr.mxu0 0.0
          %408 = vmatpush1.xpose.msra.mxu0 0.0
          %409 = vmatprep.subr.mxu0 0.0
          %410 = vmatpush1.xpose.msra.mxu0 0.0
          %411 = vmatprep.subr.mxu0 0.0
          %412 = vmatpush1.xpose.msra.mxu0 0.0
          %413 = vmatprep.subr.mxu0 0.0
          %414 = vmatpush1.xpose.msra.mxu0 0.0
          %415 = vmatprep.subr.mxu0 0.0
          %416 = vmatpush1.xpose.msra.mxu0 0.0
          %417 = vmatprep.subr.mxu0 0.0
          %418 = vmatpush1.xpose.msra.mxu0 0.0
          %419 = vmatprep.subr.mxu0 0.0
          %420 = vmatpush1.xpose.msra.mxu0 0.0
          %421 = vmatprep.subr.mxu0 0.0
          %422 = vmatpush1.xpose.msra.mxu0 0.0
          %423 = vmatprep.subr.mxu0 0.0
          %424 = vmatpush1.xpose.msra.mxu0 0.0
          %425 = vmatprep.subr.mxu0 0.0
          %426 = vmatpush1.xpose.msra.mxu0 0.0
          %427 = vmatprep.subr.mxu0 0.0
          %428 = vmatpush1.xpose.msra.mxu0 0.0
          %429 = vmatprep.subr.mxu0 0.0
          %430 = vmatpush1.xpose.msra.mxu0 0.0
          %431 = vmatprep.subr.mxu0 0.0
          %432 = vmatpush1.xpose.msra.mxu0 0.0
          %433 = vmatprep.subr.mxu0 0.0
          %434 = vmatpush1.xpose.msra.mxu0 0.0
          %435 = vmatprep.subr.mxu0 0.0
          %436 = vmatpush1.xpose.msra.mxu0 0.0
          %437 = vmatprep.subr.mxu0 0.0
          %438 = vmatpush1.xpose.msra.mxu0 0.0
          %439 = vmatprep.mubr.f32.mxu0 %v298
          %440 = vmatmul.mubr.f32.gmra.mrb[0].mxu0 %v297
          %v441 = vpop.f32.mrb[0].mxu0
          %v442 = vadd.f32 0.0, %v441
          %v443 = vpop.f32.mrb[0].mxu0
          %444 = vdwg.mxu0
          %v445 = vadd.f32 %v303, %v372
          %v446 = vadd.f32 %v304, %v442
          %vm447 = vcmask 64512
          %448 = vst.msk [vmem:[#allocation2] sm:$0xff] %vm447, %v445
          %449 = vst.msk [vmem:[#allocation2 + $0x8] sm:$0xff] %vm447, %v446
          %v450 = vld [vmem:[#allocation3] sm:$0xff]
          %v451 = vld [vmem:[#allocation3 + $0x8] sm:$0xff]
          %452 = vmatprep.subr.mxu0 %v296
          %453 = vmatpush1.xpose.msra.mxu0 %v295
          %454 = vmatprep.subr.mxu0 0.0
          %455 = vmatpush1.xpose.msra.mxu0 0.0
          %456 = vmatprep.subr.mxu0 0.0
          %457 = vmatpush1.xpose.msra.mxu0 0.0
          %458 = vmatprep.subr.mxu0 0.0
          %459 = vmatpush1.xpose.msra.mxu0 0.0
          %460 = vmatprep.subr.mxu0 0.0
          %461 = vmatpush1.xpose.msra.mxu0 0.0
          %462 = vmatprep.subr.mxu0 0.0
          %463 = vmatpush1.xpose.msra.mxu0 0.0
          %464 = vmatprep.subr.mxu0 0.0
          %465 = vmatpush1.xpose.msra.mxu0 0.0
          %466 = vmatprep.subr.mxu0 0.0
          %467 = vmatpush1.xpose.msra.mxu0 0.0
          %468 = vmatprep.subr.mxu0 0.0
          %469 = vmatpush1.xpose.msra.mxu0 0.0
          %470 = vmatprep.subr.mxu0 0.0
          %471 = vmatpush1.xpose.msra.mxu0 0.0
          %472 = vmatprep.subr.mxu0 0.0
          %473 = vmatpush1.xpose.msra.mxu0 0.0
          %474 = vmatprep.subr.mxu0 0.0
          %475 = vmatpush1.xpose.msra.mxu0 0.0
          %476 = vmatprep.subr.mxu0 0.0
          %477 = vmatpush1.xpose.msra.mxu0 0.0
          %478 = vmatprep.subr.mxu0 0.0
          %479 = vmatpush1.xpose.msra.mxu0 0.0
          %480 = vmatprep.subr.mxu0 0.0
          %481 = vmatpush1.xpose.msra.mxu0 0.0
          %482 = vmatprep.subr.mxu0 0.0
          %483 = vmatpush1.xpose.msra.mxu0 0.0
          %484 = vmatprep.subr.mxu0 0.0
          %485 = vmatpush1.xpose.msra.mxu0 0.0
          %486 = vmatprep.subr.mxu0 0.0
          %487 = vmatpush1.xpose.msra.mxu0 0.0
          %488 = vmatprep.subr.mxu0 0.0
          %489 = vmatpush1.xpose.msra.mxu0 0.0
          %490 = vmatprep.subr.mxu0 0.0
          %491 = vmatpush1.xpose.msra.mxu0 0.0
          %492 = vmatprep.subr.mxu0 0.0
          %493 = vmatpush1.xpose.msra.mxu0 0.0
          %494 = vmatprep.subr.mxu0 0.0
          %495 = vmatpush1.xpose.msra.mxu0 0.0
          %496 = vmatprep.subr.mxu0 0.0
          %497 = vmatpush1.xpose.msra.mxu0 0.0
          %498 = vmatprep.subr.mxu0 0.0
          %499 = vmatpush1.xpose.msra.mxu0 0.0
          %500 = vmatprep.subr.mxu0 0.0
          %501 = vmatpush1.xpose.msra.mxu0 0.0
          %502 = vmatprep.subr.mxu0 0.0
          %503 = vmatpush1.xpose.msra.mxu0 0.0
          %504 = vmatprep.subr.mxu0 0.0
          %505 = vmatpush1.xpose.msra.mxu0 0.0
          %506 = vmatprep.subr.mxu0 0.0
          %507 = vmatpush1.xpose.msra.mxu0 0.0
          %508 = vmatprep.subr.mxu0 0.0
          %509 = vmatpush1.xpose.msra.mxu0 0.0
          %510 = vmatprep.subr.mxu0 0.0
          %511 = vmatpush1.xpose.msra.mxu0 0.0
          %512 = vmatprep.subr.mxu0 0.0
          %513 = vmatpush1.xpose.msra.mxu0 0.0
          %514 = vmatprep.subr.mxu0 0.0
          %515 = vmatpush1.xpose.msra.mxu0 0.0
          %516 = vmatprep.mubr.f32.mxu0 %v300
          %517 = vmatmul.mubr.f32.gmra.mrb[0].mxu0 %v299
          %v518 = vpop.f32.mrb[0].mxu0
          %v519 = vadd.f32 0.0, %v518
          %v520 = vpop.f32.mrb[0].mxu0
          %521 = vdwg.mxu0
          %522 = vmatprep.subr.mxu0 %v298
          %523 = vmatpush1.xpose.msra.mxu0 %v297
          %524 = vmatprep.subr.mxu0 0.0
          %525 = vmatpush1.xpose.msra.mxu0 0.0
          %526 = vmatprep.subr.mxu0 0.0
          %527 = vmatpush1.xpose.msra.mxu0 0.0
          %528 = vmatprep.subr.mxu0 0.0
          %529 = vmatpush1.xpose.msra.mxu0 0.0
          %530 = vmatprep.subr.mxu0 0.0
          %531 = vmatpush1.xpose.msra.mxu0 0.0
          %532 = vmatprep.subr.mxu0 0.0
          %533 = vmatpush1.xpose.msra.mxu0 0.0
          %534 = vmatprep.subr.mxu0 0.0
          %535 = vmatpush1.xpose.msra.mxu0 0.0
          %536 = vmatprep.subr.mxu0 0.0
          %537 = vmatpush1.xpose.msra.mxu0 0.0
          %538 = vmatprep.subr.mxu0 0.0
          %539 = vmatpush1.xpose.msra.mxu0 0.0
          %540 = vmatprep.subr.mxu0 0.0
          %541 = vmatpush1.xpose.msra.mxu0 0.0
          %542 = vmatprep.subr.mxu0 0.0
          %543 = vmatpush1.xpose.msra.mxu0 0.0
          %544 = vmatprep.subr.mxu0 0.0
          %545 = vmatpush1.xpose.msra.mxu0 0.0
          %546 = vmatprep.subr.mxu0 0.0
          %547 = vmatpush1.xpose.msra.mxu0 0.0
          %548 = vmatprep.subr.mxu0 0.0
          %549 = vmatpush1.xpose.msra.mxu0 0.0
          %550 = vmatprep.subr.mxu0 0.0
          %551 = vmatpush1.xpose.msra.mxu0 0.0
          %552 = vmatprep.subr.mxu0 0.0
          %553 = vmatpush1.xpose.msra.mxu0 0.0
          %554 = vmatprep.subr.mxu0 0.0
          %555 = vmatpush1.xpose.msra.mxu0 0.0
          %556 = vmatprep.subr.mxu0 0.0
          %557 = vmatpush1.xpose.msra.mxu0 0.0
          %558 = vmatprep.subr.mxu0 0.0
          %559 = vmatpush1.xpose.msra.mxu0 0.0
          %560 = vmatprep.subr.mxu0 0.0
          %561 = vmatpush1.xpose.msra.mxu0 0.0
          %562 = vmatprep.subr.mxu0 0.0
          %563 = vmatpush1.xpose.msra.mxu0 0.0
          %564 = vmatprep.subr.mxu0 0.0
          %565 = vmatpush1.xpose.msra.mxu0 0.0
          %566 = vmatprep.subr.mxu0 0.0
          %567 = vmatpush1.xpose.msra.mxu0 0.0
          %568 = vmatprep.subr.mxu0 0.0
          %569 = vmatpush1.xpose.msra.mxu0 0.0
          %570 = vmatprep.subr.mxu0 0.0
          %571 = vmatpush1.xpose.msra.mxu0 0.0
          %572 = vmatprep.subr.mxu0 0.0
          %573 = vmatpush1.xpose.msra.mxu0 0.0
          %574 = vmatprep.subr.mxu0 0.0
          %575 = vmatpush1.xpose.msra.mxu0 0.0
          %576 = vmatprep.subr.mxu0 0.0
          %577 = vmatpush1.xpose.msra.mxu0 0.0
          %578 = vmatprep.subr.mxu0 0.0
          %579 = vmatpush1.xpose.msra.mxu0 0.0
          %580 = vmatprep.subr.mxu0 0.0
          %581 = vmatpush1.xpose.msra.mxu0 0.0
          %582 = vmatprep.subr.mxu0 0.0
          %583 = vmatpush1.xpose.msra.mxu0 0.0
          %584 = vmatprep.subr.mxu0 0.0
          %585 = vmatpush1.xpose.msra.mxu0 0.0
          %586 = vmatprep.mubr.f32.mxu0 %v302
          %587 = vmatmul.mubr.f32.gmra.mrb[0].mxu0 %v301
          %v588 = vpop.f32.mrb[0].mxu0
          %v589 = vadd.f32 0.0, %v588
          %v590 = vpop.f32.mrb[0].mxu0
          %591 = vdwg.mxu0
          %v592 = vadd.f32 %v450, %v519
          %v593 = vadd.f32 %v451, %v589
          %594 = vst.msk [vmem:[#allocation3] sm:$0xff] %vm447, %v592
          %595 = vst.msk [vmem:[#allocation3 + $0x8] sm:$0xff] %vm447, %v593
        $region48: #{tpu_custom_call.1} parent=31 // pred_fallthru
          _
        %p596 = scmp.eq.s32.totalorder %s31, 1
        // Predicated region
        $region49: #{tpu_custom_call.1} parent=31 // pred_check
          %p597 = pneg %p596
        $region50: #{tpu_custom_call.1} parent=31 // pred_check_branch
          %599 = sbr.rel (%p597) target = $region52
        $region51: #{tpu_custom_call.1} parent=31 // pred_region
          // Predicated region
          $region53: #{tpu_custom_call.1} parent=51 // pred_check
            %p600 = pneg %p282
          $region54: #{tpu_custom_call.1} parent=51 // pred_check_branch
            %602 = sbr.rel (%p600) target = $region56
          $region55: #{tpu_custom_call.1} parent=51 // pred_region
            %v603 = vld [vmem:[#allocation2] sm:$0xff]
            %v604 = vld [vmem:[#allocation2 + $0x8] sm:$0xff]
            %vm605 = vcmask 64512
            %v606 = vsel %vm605, %v603, inf
            %607 = vmin.xlane.f32.xlu0 %v606
            %v608 = vpop.xlane.xlu0 %607
            %v609 = vsel %vm605, %v604, inf
            %610 = vmin.xlane.f32.xlu0 %v609
            %v611 = vpop.xlane.xlu0 %610
            %v612 = vsub.f32 %v608, %v603
            %v613 = vsub.f32 %v611, %v604
            %v614 = vmul.f32 %v612, 1.442695
            %v615 = vpow.pop %v614
            %v616 = vmul.f32 %v613, 1.442695
            %v617 = vpow.pop %v616
            %v618 = vsel %vm605, %v615, 0.0
            %619 = vadd.xlane.f32.xlu0 %v618
            %v620 = vpop.xlane.xlu0 %619
            %v621 = vsel %vm605, %v617, 0.0
            %622 = vadd.xlane.f32.xlu0 %v621
            %v623 = vpop.xlane.xlu0 %622
            %v624 = vrcp.pop %v620
            %v625 = vrcp.pop %v623
            %v626 = vmul.f32 %v615, %v624
            %v627 = vmul.f32 %v617, %v625
            %628 = vst.msk [vmem:[#allocation2] sm:$0xff] %vm605, %v626
            %629 = vst.msk [vmem:[#allocation2 + $0x8] sm:$0xff] %vm605, %v627
            %v630 = vld [vmem:[#allocation3] sm:$0xff]
            %v631 = vld [vmem:[#allocation3 + $0x8] sm:$0xff]
            %v632 = vsel %vm605, %v630, inf
            %633 = vmin.xlane.f32.xlu0 %v632
            %v634 = vpop.xlane.xlu0 %633
            %v635 = vsel %vm605, %v631, inf
            %636 = vmin.xlane.f32.xlu0 %v635
            %v637 = vpop.xlane.xlu0 %636
            %v638 = vsub.f32 %v634, %v630
            %v639 = vsub.f32 %v637, %v631
            %v640 = vmul.f32 %v638, 1.442695
            %v641 = vpow.pop %v640
            %v642 = vmul.f32 %v639, 1.442695
            %v643 = vpow.pop %v642
            %v644 = vsel %vm605, %v641, 0.0
            %645 = vadd.xlane.f32.xlu0 %v644
            %v646 = vpop.xlane.xlu0 %645
            %v647 = vsel %vm605, %v643, 0.0
            %648 = vadd.xlane.f32.xlu0 %v647
            %v649 = vpop.xlane.xlu0 %648
            %v650 = vrcp.pop %v646
            %v651 = vrcp.pop %v649
            %v652 = vmul.f32 %v641, %v650
            %v653 = vmul.f32 %v643, %v651
            %654 = vst.msk [vmem:[#allocation3] sm:$0xff] %vm605, %v652
            %655 = vst.msk [vmem:[#allocation3 + $0x8] sm:$0xff] %vm605, %v653
          $region56: #{tpu_custom_call.1} parent=51 // pred_fallthru
            _
          %s656 = sld [smem:[#allocation4]]
          %v657 = vld [vmem:[#allocation5] sm:$0xff]
          %v658 = vld [vmem:[#allocation5 + $0x8] sm:$0xff]
          %v659 = vld [vmem:[#allocation5 + $0x10] sm:$0xff]
          %v660 = vld [vmem:[#allocation5 + $0x18] sm:$0xff]
          %v661 = vld [vmem:[#allocation8] sm:$0xff]
          %v662 = vld [vmem:[#allocation8 + $0x8] sm:$0xff]
          %v663 = vld [vmem:[#allocation8 + $0x10] sm:$0xff]
          %v664 = vld [vmem:[#allocation8 + $0x18] sm:$0xff]
          %v665 = vld [vmem:[#allocation2] sm:$0xff]
          %v666 = vld [vmem:[#allocation2 + $0x8] sm:$0xff]
          %vm667 = vcmask 64512
          %v669 = vsel %vm667, %v665, 0
          %671 = vmatprep.subr.mxu0 %v658
          %672 = vmatpush1.msra.mxu0 %v657
          %673 = vmatprep.subr.mxu0 0.0
          %674 = vmatpush1.msra.mxu0 0.0
          %675 = vmatprep.subr.mxu0 0.0
          %676 = vmatpush1.msra.mxu0 0.0
          %677 = vmatprep.subr.mxu0 0.0
          %678 = vmatpush1.msra.mxu0 0.0
          %679 = vmatprep.subr.mxu0 0.0
          %680 = vmatpush1.msra.mxu0 0.0
          %681 = vmatprep.subr.mxu0 0.0
          %682 = vmatpush1.msra.mxu0 0.0
          %683 = vmatprep.subr.mxu0 0.0
          %684 = vmatpush1.msra.mxu0 0.0
          %685 = vmatprep.subr.mxu0 0.0
          %686 = vmatpush1.msra.mxu0 0.0
          %687 = vmatprep.subr.mxu0 0.0
          %688 = vmatpush1.msra.mxu0 0.0
          %689 = vmatprep.subr.mxu0 0.0
          %690 = vmatpush1.msra.mxu0 0.0
          %691 = vmatprep.subr.mxu0 0.0
          %692 = vmatpush1.msra.mxu0 0.0
          %693 = vmatprep.subr.mxu0 0.0
          %694 = vmatpush1.msra.mxu0 0.0
          %695 = vmatprep.subr.mxu0 0.0
          %696 = vmatpush1.msra.mxu0 0.0
          %697 = vmatprep.subr.mxu0 0.0
          %698 = vmatpush1.msra.mxu0 0.0
          %699 = vmatprep.subr.mxu0 0.0
          %700 = vmatpush1.msra.mxu0 0.0
          %701 = vmatprep.subr.mxu0 0.0
          %702 = vmatpush1.msra.mxu0 0.0
          %703 = vmatprep.subr.mxu0 0.0
          %704 = vmatpush1.msra.mxu0 0.0
          %705 = vmatprep.subr.mxu0 0.0
          %706 = vmatpush1.msra.mxu0 0.0
          %707 = vmatprep.subr.mxu0 0.0
          %708 = vmatpush1.msra.mxu0 0.0
          %709 = vmatprep.subr.mxu0 0.0
          %710 = vmatpush1.msra.mxu0 0.0
          %711 = vmatprep.subr.mxu0 0.0
          %712 = vmatpush1.msra.mxu0 0.0
          %713 = vmatprep.subr.mxu0 0.0
          %714 = vmatpush1.msra.mxu0 0.0
          %715 = vmatprep.subr.mxu0 0.0
          %716 = vmatpush1.msra.mxu0 0.0
          %717 = vmatprep.subr.mxu0 0.0
          %718 = vmatpush1.msra.mxu0 0.0
          %719 = vmatprep.subr.mxu0 0.0
          %720 = vmatpush1.msra.mxu0 0.0
          %721 = vmatprep.subr.mxu0 0.0
          %722 = vmatpush1.msra.mxu0 0.0
          %723 = vmatprep.subr.mxu0 0.0
          %724 = vmatpush1.msra.mxu0 0.0
          %725 = vmatprep.subr.mxu0 0.0
          %726 = vmatpush1.msra.mxu0 0.0
          %727 = vmatprep.subr.mxu0 0.0
          %728 = vmatpush1.msra.mxu0 0.0
          %729 = vmatprep.subr.mxu0 0.0
          %730 = vmatpush1.msra.mxu0 0.0
          %731 = vmatprep.subr.mxu0 0.0
          %732 = vmatpush1.msra.mxu0 0.0
          %733 = vmatprep.subr.mxu0 0.0
          %734 = vmatpush1.msra.mxu0 0.0
          %735 = vmatprep.mubr.f32.mxu0 0.0
          %736 = vmatmul.mubr.f32.gmra.mrb[0].mxu0 %v669
          %v737 = vpop.f32.mrb[0].mxu0
          %v738 = vadd.f32 0.0, %v737
          %v739 = vpop.f32.mrb[0].mxu0
          %v740 = vadd.f32 0.0, %v739
          %741 = vdwg.mxu0
          %v743 = vsel %vm667, %v666, 0
          %745 = vmatprep.subr.mxu0 %v660
          %746 = vmatpush1.msra.mxu0 %v659
          %747 = vmatprep.subr.mxu0 0.0
          %748 = vmatpush1.msra.mxu0 0.0
          %749 = vmatprep.subr.mxu0 0.0
          %750 = vmatpush1.msra.mxu0 0.0
          %751 = vmatprep.subr.mxu0 0.0
          %752 = vmatpush1.msra.mxu0 0.0
          %753 = vmatprep.subr.mxu0 0.0
          %754 = vmatpush1.msra.mxu0 0.0
          %755 = vmatprep.subr.mxu0 0.0
          %756 = vmatpush1.msra.mxu0 0.0
          %757 = vmatprep.subr.mxu0 0.0
          %758 = vmatpush1.msra.mxu0 0.0
          %759 = vmatprep.subr.mxu0 0.0
          %760 = vmatpush1.msra.mxu0 0.0
          %761 = vmatprep.subr.mxu0 0.0
          %762 = vmatpush1.msra.mxu0 0.0
          %763 = vmatprep.subr.mxu0 0.0
          %764 = vmatpush1.msra.mxu0 0.0
          %765 = vmatprep.subr.mxu0 0.0
          %766 = vmatpush1.msra.mxu0 0.0
          %767 = vmatprep.subr.mxu0 0.0
          %768 = vmatpush1.msra.mxu0 0.0
          %769 = vmatprep.subr.mxu0 0.0
          %770 = vmatpush1.msra.mxu0 0.0
          %771 = vmatprep.subr.mxu0 0.0
          %772 = vmatpush1.msra.mxu0 0.0
          %773 = vmatprep.subr.mxu0 0.0
          %774 = vmatpush1.msra.mxu0 0.0
          %775 = vmatprep.subr.mxu0 0.0
          %776 = vmatpush1.msra.mxu0 0.0
          %777 = vmatprep.subr.mxu0 0.0
          %778 = vmatpush1.msra.mxu0 0.0
          %779 = vmatprep.subr.mxu0 0.0
          %780 = vmatpush1.msra.mxu0 0.0
          %781 = vmatprep.subr.mxu0 0.0
          %782 = vmatpush1.msra.mxu0 0.0
          %783 = vmatprep.subr.mxu0 0.0
          %784 = vmatpush1.msra.mxu0 0.0
          %785 = vmatprep.subr.mxu0 0.0
          %786 = vmatpush1.msra.mxu0 0.0
          %787 = vmatprep.subr.mxu0 0.0
          %788 = vmatpush1.msra.mxu0 0.0
          %789 = vmatprep.subr.mxu0 0.0
          %790 = vmatpush1.msra.mxu0 0.0
          %791 = vmatprep.subr.mxu0 0.0
          %792 = vmatpush1.msra.mxu0 0.0
          %793 = vmatprep.subr.mxu0 0.0
          %794 = vmatpush1.msra.mxu0 0.0
          %795 = vmatprep.subr.mxu0 0.0
          %796 = vmatpush1.msra.mxu0 0.0
          %797 = vmatprep.subr.mxu0 0.0
          %798 = vmatpush1.msra.mxu0 0.0
          %799 = vmatprep.subr.mxu0 0.0
          %800 = vmatpush1.msra.mxu0 0.0
          %801 = vmatprep.subr.mxu0 0.0
          %802 = vmatpush1.msra.mxu0 0.0
          %803 = vmatprep.subr.mxu0 0.0
          %804 = vmatpush1.msra.mxu0 0.0
          %805 = vmatprep.subr.mxu0 0.0
          %806 = vmatpush1.msra.mxu0 0.0
          %807 = vmatprep.subr.mxu0 0.0
          %808 = vmatpush1.msra.mxu0 0.0
          %809 = vmatprep.mubr.f32.mxu0 0.0
          %810 = vmatmul.mubr.f32.gmra.mrb[0].mxu0 %v743
          %v811 = vpop.f32.mrb[0].mxu0
          %v812 = vadd.f32 0.0, %v811
          %v813 = vpop.f32.mrb[0].mxu0
          %v814 = vadd.f32 0.0, %v813
          %815 = vdwg.mxu0
          %v816 = vld [vmem:[#allocation3] sm:$0xff]
          %v817 = vld [vmem:[#allocation3 + $0x8] sm:$0xff]
          %v819 = vsel %vm667, %v816, 0
          %821 = vmatprep.subr.mxu0 %v662
          %822 = vmatpush1.msra.mxu0 %v661
          %823 = vmatprep.subr.mxu0 0.0
          %824 = vmatpush1.msra.mxu0 0.0
          %825 = vmatprep.subr.mxu0 0.0
          %826 = vmatpush1.msra.mxu0 0.0
          %827 = vmatprep.subr.mxu0 0.0
          %828 = vmatpush1.msra.mxu0 0.0
          %829 = vmatprep.subr.mxu0 0.0
          %830 = vmatpush1.msra.mxu0 0.0
          %831 = vmatprep.subr.mxu0 0.0
          %832 = vmatpush1.msra.mxu0 0.0
          %833 = vmatprep.subr.mxu0 0.0
          %834 = vmatpush1.msra.mxu0 0.0
          %835 = vmatprep.subr.mxu0 0.0
          %836 = vmatpush1.msra.mxu0 0.0
          %837 = vmatprep.subr.mxu0 0.0
          %838 = vmatpush1.msra.mxu0 0.0
          %839 = vmatprep.subr.mxu0 0.0
          %840 = vmatpush1.msra.mxu0 0.0
          %841 = vmatprep.subr.mxu0 0.0
          %842 = vmatpush1.msra.mxu0 0.0
          %843 = vmatprep.subr.mxu0 0.0
          %844 = vmatpush1.msra.mxu0 0.0
          %845 = vmatprep.subr.mxu0 0.0
          %846 = vmatpush1.msra.mxu0 0.0
          %847 = vmatprep.subr.mxu0 0.0
          %848 = vmatpush1.msra.mxu0 0.0
          %849 = vmatprep.subr.mxu0 0.0
          %850 = vmatpush1.msra.mxu0 0.0
          %851 = vmatprep.subr.mxu0 0.0
          %852 = vmatpush1.msra.mxu0 0.0
          %853 = vmatprep.subr.mxu0 0.0
          %854 = vmatpush1.msra.mxu0 0.0
          %855 = vmatprep.subr.mxu0 0.0
          %856 = vmatpush1.msra.mxu0 0.0
          %857 = vmatprep.subr.mxu0 0.0
          %858 = vmatpush1.msra.mxu0 0.0
          %859 = vmatprep.subr.mxu0 0.0
          %860 = vmatpush1.msra.mxu0 0.0
          %861 = vmatprep.subr.mxu0 0.0
          %862 = vmatpush1.msra.mxu0 0.0
          %863 = vmatprep.subr.mxu0 0.0
          %864 = vmatpush1.msra.mxu0 0.0
          %865 = vmatprep.subr.mxu0 0.0
          %866 = vmatpush1.msra.mxu0 0.0
          %867 = vmatprep.subr.mxu0 0.0
          %868 = vmatpush1.msra.mxu0 0.0
          %869 = vmatprep.subr.mxu0 0.0
          %870 = vmatpush1.msra.mxu0 0.0
          %871 = vmatprep.subr.mxu0 0.0
          %872 = vmatpush1.msra.mxu0 0.0
          %873 = vmatprep.subr.mxu0 0.0
          %874 = vmatpush1.msra.mxu0 0.0
          %875 = vmatprep.subr.mxu0 0.0
          %876 = vmatpush1.msra.mxu0 0.0
          %877 = vmatprep.subr.mxu0 0.0
          %878 = vmatpush1.msra.mxu0 0.0
          %879 = vmatprep.subr.mxu0 0.0
          %880 = vmatpush1.msra.mxu0 0.0
          %881 = vmatprep.subr.mxu0 0.0
          %882 = vmatpush1.msra.mxu0 0.0
          %883 = vmatprep.subr.mxu0 0.0
          %884 = vmatpush1.msra.mxu0 0.0
          %885 = vmatprep.mubr.f32.mxu0 0.0
          %886 = vmatmul.mubr.f32.gmra.mrb[0].mxu0 %v819
          %v887 = vpop.f32.mrb[0].mxu0
          %v888 = vadd.f32 0.0, %v887
          %v889 = vpop.f32.mrb[0].mxu0
          %v890 = vadd.f32 0.0, %v889
          %891 = vdwg.mxu0
          %v893 = vsel %vm667, %v817, 0
          %895 = vmatprep.subr.mxu0 %v664
          %896 = vmatpush1.msra.mxu0 %v663
          %897 = vmatprep.subr.mxu0 0.0
          %898 = vmatpush1.msra.mxu0 0.0
          %899 = vmatprep.subr.mxu0 0.0
          %900 = vmatpush1.msra.mxu0 0.0
          %901 = vmatprep.subr.mxu0 0.0
          %902 = vmatpush1.msra.mxu0 0.0
          %903 = vmatprep.subr.mxu0 0.0
          %904 = vmatpush1.msra.mxu0 0.0
          %905 = vmatprep.subr.mxu0 0.0
          %906 = vmatpush1.msra.mxu0 0.0
          %907 = vmatprep.subr.mxu0 0.0
          %908 = vmatpush1.msra.mxu0 0.0
          %909 = vmatprep.subr.mxu0 0.0
          %910 = vmatpush1.msra.mxu0 0.0
          %911 = vmatprep.subr.mxu0 0.0
          %912 = vmatpush1.msra.mxu0 0.0
          %913 = vmatprep.subr.mxu0 0.0
          %914 = vmatpush1.msra.mxu0 0.0
          %915 = vmatprep.subr.mxu0 0.0
          %916 = vmatpush1.msra.mxu0 0.0
          %917 = vmatprep.subr.mxu0 0.0
          %918 = vmatpush1.msra.mxu0 0.0
          %919 = vmatprep.subr.mxu0 0.0
          %920 = vmatpush1.msra.mxu0 0.0
          %921 = vmatprep.subr.mxu0 0.0
          %922 = vmatpush1.msra.mxu0 0.0
          %923 = vmatprep.subr.mxu0 0.0
          %924 = vmatpush1.msra.mxu0 0.0
          %925 = vmatprep.subr.mxu0 0.0
          %926 = vmatpush1.msra.mxu0 0.0
          %927 = vmatprep.subr.mxu0 0.0
          %928 = vmatpush1.msra.mxu0 0.0
          %929 = vmatprep.subr.mxu0 0.0
          %930 = vmatpush1.msra.mxu0 0.0
          %931 = vmatprep.subr.mxu0 0.0
          %932 = vmatpush1.msra.mxu0 0.0
          %933 = vmatprep.subr.mxu0 0.0
          %934 = vmatpush1.msra.mxu0 0.0
          %935 = vmatprep.subr.mxu0 0.0
          %936 = vmatpush1.msra.mxu0 0.0
          %937 = vmatprep.subr.mxu0 0.0
          %938 = vmatpush1.msra.mxu0 0.0
          %939 = vmatprep.subr.mxu0 0.0
          %940 = vmatpush1.msra.mxu0 0.0
          %941 = vmatprep.subr.mxu0 0.0
          %942 = vmatpush1.msra.mxu0 0.0
          %943 = vmatprep.subr.mxu0 0.0
          %944 = vmatpush1.msra.mxu0 0.0
          %945 = vmatprep.subr.mxu0 0.0
          %946 = vmatpush1.msra.mxu0 0.0
          %947 = vmatprep.subr.mxu0 0.0
          %948 = vmatpush1.msra.mxu0 0.0
          %949 = vmatprep.subr.mxu0 0.0
          %950 = vmatpush1.msra.mxu0 0.0
          %951 = vmatprep.subr.mxu0 0.0
          %952 = vmatpush1.msra.mxu0 0.0
          %953 = vmatprep.subr.mxu0 0.0
          %954 = vmatpush1.msra.mxu0 0.0
          %955 = vmatprep.subr.mxu0 0.0
          %956 = vmatpush1.msra.mxu0 0.0
          %957 = vmatprep.subr.mxu0 0.0
          %958 = vmatpush1.msra.mxu0 0.0
          %959 = vmatprep.mubr.f32.mxu0 0.0
          %960 = vmatmul.mubr.f32.gmra.mrb[0].mxu0 %v893
          %v961 = vpop.f32.mrb[0].mxu0
          %v962 = vadd.f32 0.0, %v961
          %v963 = vpop.f32.mrb[0].mxu0
          %v964 = vadd.f32 0.0, %v963
          %965 = vdwg.mxu0
          %v966 = vstv %s656
          %v967 = vmul.f32 %v966, %v738
          %v968 = vmul.f32 %v966, %v740
          %v969 = vmul.f32 %v966, %v812
          %v970 = vmul.f32 %v966, %v814
          %v971 = vadd.f32 %v967, %v657
          %v972 = vadd.f32 %v968, %v658
          %v973 = vadd.f32 %v969, %v659
          %v974 = vadd.f32 %v970, %v660
          %975 = vst [vmem:[%s263] sm:$0xff] %v971
          %976 = vst [vmem:[%s263 + $0x8] sm:$0xff] %v972
          %977 = vst [vmem:[%s263 + $0x10] sm:$0xff] %v973
          %978 = vst [vmem:[%s263 + $0x18] sm:$0xff] %v974
          %v979 = vmul.f32 %v966, %v888
          %v980 = vmul.f32 %v966, %v890
          %v981 = vmul.f32 %v966, %v962
          %v982 = vmul.f32 %v966, %v964
          %v983 = vadd.f32 %v979, %v661
          %v984 = vadd.f32 %v980, %v662
          %v985 = vadd.f32 %v981, %v663
          %v986 = vadd.f32 %v982, %v664
          %987 = vst [vmem:[%s270] sm:$0xff] %v983
          %988 = vst [vmem:[%s270 + $0x8] sm:$0xff] %v984
          %989 = vst [vmem:[%s270 + $0x10] sm:$0xff] %v985
          %990 = vst [vmem:[%s270 + $0x18] sm:$0xff] %v986
        $region52: #{tpu_custom_call.1} parent=31 // pred_fallthru
          _
        %s991 = sand.u32 %s133, 1
        %s992 = scalar_lea.sflag [#allocation7], %s991
        %s993 = sand.u32 %s133, 1
        %s994 = smul.addr %s993, 32
        %s995 = scalar_lea.vmem [#allocation10], %s994
        %s996 = sand.u32 %s163, 1
        %s997 = scalar_lea.sflag [#allocation12], %s996
        %s998 = sand.u32 %s163, 1
        %s999 = smul.addr %s998, 32
        %s1000 = scalar_lea.vmem [#allocation11], %s999
        // Predicated region
        $region57: #{tpu_custom_call.1} parent=31 // pred_check
          %p1001 = pneg %p143
        $region58: #{tpu_custom_call.1} parent=31 // pred_check_branch
          %1003 = sbr.rel (%p1001) target = $region60
        $region59: #{tpu_custom_call.1} parent=31 // pred_region
          %s1004 = smul.u32 %s31, %s32
          %s1005 = smul.u32 2, %s30
          %s1006 = smul.u32 2, %s1004
          %s1008 = ssub.s32 512, 512
          %1009 = vsyncadd %s992, %s1008
          %s1010 = smul.addr %s1005, 2
          %s1011 = sadd.s32 %s1006, %s1010
          %s1012 = smul.addr %s1011, 128
          %s1013 = scalar_lea.hbm %s3, %s1012
          %s1014 = sshll.u32 %s995, 4
          %s1015 = int_to_ptr.vmem [resolvable:$true] %s1014
          %1020 = dma.vmem_to_hbm [thread:$0]  %s1015, 512, %s1013, %s992, 256, 256, 16
        $region60: #{tpu_custom_call.1} parent=31 // pred_fallthru
          _
        // Predicated region
        $region61: #{tpu_custom_call.1} parent=31 // pred_check
          %p1021 = pneg %p173
        $region62: #{tpu_custom_call.1} parent=31 // pred_check_branch
          %1023 = sbr.rel (%p1021) target = $region64
        $region63: #{tpu_custom_call.1} parent=31 // pred_region
          %s1024 = smul.u32 %s31, %s32
          %s1025 = smul.u32 2, %s30
          %s1026 = smul.u32 2, %s1024
          %s1028 = ssub.s32 512, 512
          %1029 = vsyncadd %s997, %s1028
          %s1030 = smul.addr %s1025, 2
          %s1031 = sadd.s32 %s1026, %s1030
          %s1032 = smul.addr %s1031, 128
          %s1033 = scalar_lea.hbm %s4, %s1032
          %s1034 = sshll.u32 %s1000, 4
          %s1035 = int_to_ptr.vmem [resolvable:$true] %s1034
          %1040 = dma.vmem_to_hbm [thread:$0]  %s1035, 512, %s1033, %s997, 256, 256, 16
        $region64: #{tpu_custom_call.1} parent=31 // pred_fallthru
          _
      $region32: #{tpu_custom_call.1} parent=5 // pred_fallthru
        _
      %p1041 = scmp.le.s32.totalorder 2, %s20
      // Predicated region
      $region65: #{tpu_custom_call.1} parent=5 // pred_check
        %p1042 = pneg %p1041
      $region66: #{tpu_custom_call.1} parent=5 // pred_check_branch
        %1044 = sbr.rel (%p1042) target = $region68
      $region67: #{tpu_custom_call.1} parent=5 // pred_region
        %s1045 = ssub.s32 %s20, 2
        // Predicated region
        $region69: #{tpu_custom_call.1} parent=67 // pred_check
          %p1046 = pneg %p149
        $region70: #{tpu_custom_call.1} parent=67 // pred_check_branch
          %1048 = sbr.rel (%p1046) target = $region72
        $region71: #{tpu_custom_call.1} parent=67 // pred_region
          %s1049 = sand.u32 %s134, 1
          %s1050 = scalar_lea.sflag [#allocation7], %s1049
          %s1051 = sand.u32 %s134, 1
          %s1052 = smul.addr %s1051, 32
          %s1053 = scalar_lea.vmem [#allocation10], %s1052
          %1054 = dma.done %s1050, 512
        $region72: #{tpu_custom_call.1} parent=67 // pred_fallthru
          _
        // Predicated region
        $region73: #{tpu_custom_call.1} parent=67 // pred_check
          %p1055 = pneg %p179
        $region74: #{tpu_custom_call.1} parent=67 // pred_check_branch
          %1057 = sbr.rel (%p1055) target = $region76
        $region75: #{tpu_custom_call.1} parent=67 // pred_region
          %s1058 = sand.u32 %s164, 1
          %s1059 = scalar_lea.sflag [#allocation12], %s1058
          %s1060 = sand.u32 %s164, 1
          %s1061 = smul.addr %s1060, 32
          %s1062 = scalar_lea.vmem [#allocation11], %s1061
          %1063 = dma.done %s1059, 512
        $region76: #{tpu_custom_call.1} parent=67 // pred_fallthru
          _
      $region68: #{tpu_custom_call.1} parent=5 // pred_fallthru
        _
    $region6: #{tpu_custom_call.1} parent=1 // loop_footer
      %s24 = sadd.s32 1, %s20
    $region7: #{tpu_custom_call.1} parent=1 // loop_footer_branch
      %19 = sbr.rel target = $region3
    $region8: #{tpu_custom_call.1} parent=1 // loop_exit
      _
    %1064 = vsyncpa [#allocation6], 1
    %s1065 = scalar_lea.sflag [#allocation6], 1
    %1066 = vsyncpa %s1065, 1
    %1067 = vsyncpa [#allocation9], 1
    %1068 = vsyncpa [#allocation7], 1
    %s1069 = scalar_lea.sflag [#allocation7], 1
    %1070 = vsyncpa %s1069, 1
    %1071 = vsyncpa [#allocation12], 1
    %s1072 = scalar_lea.sflag [#allocation12], 1
    %1073 = vsyncpa %s1072, 1

</llo_original>
